<compile_context>
chip_gen: v5e
topology: v5e:2x2
jax: 0.10.0
libtpu: 0.0.40
codegen_flags: <defaults>
</compile_context>

<pallas_src>
import math

import jax
import jax.numpy as jnp
from jax.experimental import pallas as pl
from jax.experimental.pallas import tpu as pltpu

LANE = 128


def _round_up(x, m):
    return ((x + m - 1) // m) * m


# ------------------------------- kernel --------------------------------------

def _make_kqv_kernel(*, B, Lq, Lk, inv_scale, has_mask, return_att, lkp):
    """Fused KQV forward. Inputs arrive pre-flattened / lane-padded:
         qf: (B*Lq, Din), kf/vf: (B*Lk, Din)
         wq/wk: (Din, DQP), wv: (Din, DKP), biases: (1, DQP/DKP)  (zero-padded)
         scale: (1,) in SMEM ; mask (optional): (B, Lq, Lk) bool
       Outputs (lane-dense 128-wide slabs, sliced in the wrapper):
         out: (B, Lq, DKP) ; att: (B, Lq, LKP) (only if return_att)
    """

    def kernel(*refs):
        it = iter(refs)
        q_ref = next(it); k_ref = next(it); v_ref = next(it)
        m_ref = next(it) if has_mask else None
        wq_ref = next(it); bq_ref = next(it)
        wk_ref = next(it); bk_ref = next(it)
        wv_ref = next(it); bv_ref = next(it)
        s_ref = next(it)
        out_ref = next(it)
        att_ref = next(it) if return_att else None

        dqp = wq_ref.shape[1]
        dkp = wv_ref.shape[1]

        # ---- projections: one fat matmul per projection over all B*L rows ----
        qp = jnp.dot(q_ref[...], wq_ref[...],
                     preferred_element_type=jnp.float32) + bq_ref[...]
        kp = jnp.dot(k_ref[...], wk_ref[...],
                     preferred_element_type=jnp.float32) + bk_ref[...]
        vp = jnp.dot(v_ref[...], wv_ref[...],
                     preferred_element_type=jnp.float32) + bv_ref[...]

        qp = qp.reshape(B, Lq, dqp)
        kp = kp.reshape(B, Lk, dqp)
        vp = vp.reshape(B, Lk, dkp)

        # ---- q @ k^T (batched, contract padded lane dim; zero pads add 0) ----
        logits = jnp.einsum('bqd,bkd->bqk', qp, kp,
                            preferred_element_type=jnp.float32)
        if has_mask:
            # matches torch masked_fill(mask, -inf) exactly (incl. NaN on a
            # fully-masked row)
            logits = jnp.where(m_ref[...], -jnp.inf, logits)
        logits = logits * inv_scale

        # ---- numerically-stable softmax; reciprocal rides the EUP slot -------
        logits = logits - jnp.max(logits, axis=-1, keepdims=True)
        e = jnp.exp(logits)
        att = e * pl.reciprocal(jnp.sum(e, axis=-1, keepdims=True), approx=True)

        # ---- att @ v, learnable scalar applied in-kernel ----------------------
        out = jnp.einsum('bqk,bkd->bqd', att, vp,
                         preferred_element_type=jnp.float32)
        out_ref[...] = s_ref[0] * out               # (B, Lq, 128) lane-dense

        if return_att:
            if lkp > Lk:
                att = jnp.concatenate(
                    [att, jnp.zeros((B, Lq, lkp - Lk), jnp.float32)], axis=-1)
            att_ref[...] = att                      # (B, Lq, 128) lane-dense

    return kernel


# ------------------------------- wrapper --------------------------------------

def kqv_product(query, key, value, params, mask=None, return_att=True):
    B, Lq, Din = query.shape
    _, Lk, _ = key.shape
    dim_q = params['wq'].shape[1]
    dim_k = params['wv'].shape[1]
    assert params['wk'].shape[1] == dim_q, "q @ k^T requires dim_q == dim_k(proj)"

    dqp = _round_up(dim_q, LANE)
    dkp = _round_up(dim_k, LANE)
    lkp = _round_up(Lk, LANE)
    f32 = jnp.float32

    # layout plumbing only: zero-pad projection output dims to lane width.
    def pad_w(w, p):
        return jnp.pad(w.astype(f32), ((0, 0), (0, p - w.shape[1])))

    def pad_b(b, p):
        b2 = b.astype(f32).reshape(1, -1)
        return jnp.pad(b2, ((0, 0), (0, p - b2.shape[1])))

    wq, bq = pad_w(params['wq'], dqp), pad_b(params['bq'], dqp)
    wk, bk = pad_w(params['wk'], dqp), pad_b(params['bk'], dqp)
    wv, bv = pad_w(params['wv'], dkp), pad_b(params['bv'], dkp)
    scale = jnp.reshape(params['scale'], (1,)).astype(f32)

    # flatten batch into rows so each projection is one fat MXU matmul.
    qf = query.reshape(B * Lq, Din).astype(f32)
    kf = key.reshape(B * Lk, Din).astype(f32)
    vf = value.reshape(B * Lk, Din).astype(f32)

    inv_scale = 1.0 / math.sqrt(float(dim_q))

    vmem = pl.BlockSpec(memory_space=pltpu.MemorySpace.VMEM)
    smem = pl.BlockSpec(memory_space=pltpu.MemorySpace.SMEM)

    inputs = [qf, kf, vf]
    in_specs = [vmem, vmem, vmem]
    if mask is not None:
        # keep the mask in its narrow dtype; compare/select happens on the VPU.
        inputs.append(mask if mask.dtype == jnp.bool_ else (mask != 0))
        in_specs.append(vmem)
    inputs += [wq, bq, wk, bk, wv, bv, scale]
    in_specs += [vmem] * 6 + [smem]

    out_shapes = [jax.ShapeDtypeStruct((B, Lq, dkp), f32)]
    out_specs = [vmem]
    if return_att:
        out_shapes.append(jax.ShapeDtypeStruct((B, Lq, lkp), f32))
        out_specs.append(vmem)

    kernel = _make_kqv_kernel(B=B, Lq=Lq, Lk=Lk, inv_scale=inv_scale,
                              has_mask=mask is not None,
                              return_att=return_att, lkp=lkp)

    # single grid step: whole batch at once (no per-step pipeline overhead on
    # single-TC v5e/v6e; everything resident in VMEM).
    results = pl.pallas_call(
        kernel,
        out_shape=tuple(out_shapes),
        in_specs=in_specs,
        out_specs=tuple(out_specs),
    )(*inputs)

    out = results[0][..., :dim_k]
    if return_att:
        att = results[1][..., :Lk]
        return out, att
    return out


# ------------------------------- parameter init -------------------------------

def init_params(key, dim_in, dim_q, dim_k):
    ks = jax.random.split(key, 6)

    def nrm(k, shape, s=0.1):
        return (s * jax.random.normal(k, shape)).astype(jnp.float32)

    return {
        'wq': nrm(ks[0], (dim_in, dim_q)), 'bq': nrm(ks[1], (1, dim_q)),
        'wk': nrm(ks[2], (dim_in, dim_k)), 'bk': nrm(ks[3], (1, dim_k)),
        'wv': nrm(ks[4], (dim_in, dim_k)), 'bv': nrm(ks[5], (1, dim_k)),
        'scale': jnp.asarray(1.3, jnp.float32),   # non-1 to exercise the scalar
    }


# ------------------------------- pure-JAX reference ---------------------------

def _ref_kqv(query, key, value, params, mask=None):
    q = query @ params['wq'] + params['bq']
    k = key @ params['wk'] + params['bk']
    v = value @ params['wv'] + params['bv']
    scale = q.shape[-1] ** 0.5
    att = jnp.einsum('bld,bmd->blm', q, k)
    if mask is not None:
        att = jnp.where(mask, -jnp.inf, att)
    att = jax.nn.softmax(att / scale, axis=-1)
    out = params['scale'] * jnp.einsum('blm,bmd->bld', att, v)
    return out, att


# ------------------------------------ main ------------------------------------

if __name__ == "__main__":
    B, L, dim_in, dim_q, dim_k = 2, 8, 32, 32, 32   # dim_q == dim_k for q @ k^T

    key = jax.random.PRNGKey(0)
    kq, kk, kv, kp = jax.random.split(key, 4)
    query = jax.random.normal(kq, (B, L, dim_in), jnp.float32)
    key_in = jax.random.normal(kk, (B, L, dim_in), jnp.float32)
    value = jax.random.normal(kv, (B, L, dim_in), jnp.float32)
    params = init_params(kp, dim_in, dim_q, dim_k)

    # --- unmasked path ---
    f = jax.jit(lambda q, k, v, p: kqv_product(q, k, v, p))
    out, att = f(query, key_in, value, params)
    jax.block_until_ready((out, att))
    out_r, att_r = _ref_kqv(query, key_in, value, params)
    assert out.shape == (B, L, dim_k) and att.shape == (B, L, L)
    assert jnp.allclose(out, out_r, atol=2e-3, rtol=2e-3), "output mismatch (no mask)"
    assert jnp.allclose(att, att_r, atol=2e-3, rtol=2e-3), "attention mismatch (no mask)"

    # --- masked path (causal) ---
    causal = jnp.triu(jnp.ones((L, L), jnp.bool_), k=1)
    mask = jnp.broadcast_to(causal, (B, L, L))
    fm = jax.jit(lambda q, k, v, p, m: kqv_product(q, k, v, p, mask=m))
    out_m, att_m = fm(query, key_in, value, params, mask)
    jax.block_until_ready((out_m, att_m))
    out_mr, att_mr = _ref_kqv(query, key_in, value, params, mask=mask)
    assert jnp.allclose(out_m, out_mr, atol=2e-3, rtol=2e-3), "output mismatch (masked)"
    assert jnp.allclose(att_m, att_mr, atol=2e-3, rtol=2e-3), "attention mismatch (masked)"

    # --- return_att=False path (no attention writeback at all) ---
    fo = jax.jit(lambda q, k, v, p: kqv_product(q, k, v, p, return_att=False))
    out_only = fo(query, key_in, value, params)
    jax.block_until_ready(out_only)
    assert jnp.allclose(out_only, out_r, atol=2e-3, rtol=2e-3), "output mismatch (no att)"

    print("KERNEL_OK")
</pallas_src>

<mosaic_0001>
module attributes {stable_mosaic.version = 11 : i64} {
  func.func @kernel(%arg0: memref<16x32xf32, #tpu.memory_space<vmem>>, %arg1: memref<16x32xf32, #tpu.memory_space<vmem>>, %arg2: memref<16x32xf32, #tpu.memory_space<vmem>>, %arg3: memref<32x128xf32, #tpu.memory_space<vmem>>, %arg4: memref<1x128xf32, #tpu.memory_space<vmem>>, %arg5: memref<32x128xf32, #tpu.memory_space<vmem>>, %arg6: memref<1x128xf32, #tpu.memory_space<vmem>>, %arg7: memref<32x128xf32, #tpu.memory_space<vmem>>, %arg8: memref<1x128xf32, #tpu.memory_space<vmem>>, %arg9: memref<1xf32, #tpu.memory_space<smem>>, %arg10: memref<2x8x128xf32, #tpu.memory_space<vmem>>, %arg11: memref<2x8x128xf32, #tpu.memory_space<vmem>>) attributes {dimension_semantics = [], scalar_prefetch = 0 : i64, scratch_operands = 0 : i64, tpu.core_type = #tpu.core_type<tc>} {
    %c0 = arith.constant 0 : index
    %c0_0 = arith.constant 0 : index
    %0 = vector.load %arg0[%c0, %c0_0] : memref<16x32xf32, #tpu.memory_space<vmem>>, vector<16x32xf32>
    %c0_1 = arith.constant 0 : index
    %c0_2 = arith.constant 0 : index
    %1 = vector.load %arg3[%c0_1, %c0_2] : memref<32x128xf32, #tpu.memory_space<vmem>>, vector<32x128xf32>
    %cst = arith.constant dense<0.000000e+00> : vector<16x128xf32>
    %2 = tpu.matmul %0, %1, %cst {dimension_numbers = #tpu.dot_dimension_numbers<[1], [0], [0], [1], [0, 0, 1, 1], [], []>} : vector<16x32xf32>, vector<32x128xf32>, vector<16x128xf32> -> vector<16x128xf32>
    %c0_3 = arith.constant 0 : index
    %c0_4 = arith.constant 0 : index
    %3 = vector.load %arg4[%c0_3, %c0_4] : memref<1x128xf32, #tpu.memory_space<vmem>>, vector<1x128xf32>
    %4 = vector.broadcast %3 : vector<1x128xf32> to vector<16x128xf32>
    %5 = arith.addf %2, %4 : vector<16x128xf32>
    %c0_5 = arith.constant 0 : index
    %c0_6 = arith.constant 0 : index
    %6 = vector.load %arg1[%c0_5, %c0_6] : memref<16x32xf32, #tpu.memory_space<vmem>>, vector<16x32xf32>
    %c0_7 = arith.constant 0 : index
    %c0_8 = arith.constant 0 : index
    %7 = vector.load %arg5[%c0_7, %c0_8] : memref<32x128xf32, #tpu.memory_space<vmem>>, vector<32x128xf32>
    %cst_9 = arith.constant dense<0.000000e+00> : vector<16x128xf32>
    %8 = tpu.matmul %6, %7, %cst_9 {dimension_numbers = #tpu.dot_dimension_numbers<[1], [0], [0], [1], [0, 0, 1, 1], [], []>} : vector<16x32xf32>, vector<32x128xf32>, vector<16x128xf32> -> vector<16x128xf32>
    %c0_10 = arith.constant 0 : index
    %c0_11 = arith.constant 0 : index
    %9 = vector.load %arg6[%c0_10, %c0_11] : memref<1x128xf32, #tpu.memory_space<vmem>>, vector<1x128xf32>
    %10 = vector.broadcast %9 : vector<1x128xf32> to vector<16x128xf32>
    %11 = arith.addf %8, %10 : vector<16x128xf32>
    %c0_12 = arith.constant 0 : index
    %c0_13 = arith.constant 0 : index
    %12 = vector.load %arg2[%c0_12, %c0_13] : memref<16x32xf32, #tpu.memory_space<vmem>>, vector<16x32xf32>
    %c0_14 = arith.constant 0 : index
    %c0_15 = arith.constant 0 : index
    %13 = vector.load %arg7[%c0_14, %c0_15] : memref<32x128xf32, #tpu.memory_space<vmem>>, vector<32x128xf32>
    %cst_16 = arith.constant dense<0.000000e+00> : vector<16x128xf32>
    %14 = tpu.matmul %12, %13, %cst_16 {dimension_numbers = #tpu.dot_dimension_numbers<[1], [0], [0], [1], [0, 0, 1, 1], [], []>} : vector<16x32xf32>, vector<32x128xf32>, vector<16x128xf32> -> vector<16x128xf32>
    %c0_17 = arith.constant 0 : index
    %c0_18 = arith.constant 0 : index
    %15 = vector.load %arg8[%c0_17, %c0_18] : memref<1x128xf32, #tpu.memory_space<vmem>>, vector<1x128xf32>
    %16 = vector.broadcast %15 : vector<1x128xf32> to vector<16x128xf32>
    %17 = arith.addf %14, %16 : vector<16x128xf32>
    %18 = vector.shape_cast %5 : vector<16x128xf32> to vector<2x8x128xf32>
    %19 = vector.shape_cast %11 : vector<16x128xf32> to vector<2x8x128xf32>
    %20 = vector.shape_cast %17 : vector<16x128xf32> to vector<2x8x128xf32>
    "tpu.trace_start"() <{level = 10 : i32, message = "bqd,bkd->bqk"}> : () -> ()
    %cst_19 = arith.constant dense<0.000000e+00> : vector<2x8x8xf32>
    %21 = tpu.matmul %18, %19, %cst_19 {dimension_numbers = #tpu.dot_dimension_numbers<[2], [2], [1], [1], [0, 0, 0, 1, 1, 1], [0], [0]>} : vector<2x8x128xf32>, vector<2x8x128xf32>, vector<2x8x8xf32> -> vector<2x8x8xf32>
    "tpu.trace_stop"() : () -> ()
    %cst_20 = arith.constant 0.176776692 : f32
    %22 = vector.broadcast %cst_20 : f32 to vector<2x8x8xf32>
    %23 = arith.mulf %21, %22 : vector<2x8x8xf32>
    %cst_21 = arith.constant dense<0xFF800000> : vector<2x8xf32>
    %24 = vector.multi_reduction <maximumf>, %23, %cst_21 [2] : vector<2x8x8xf32> to vector<2x8xf32>
    %25 = vector.shape_cast %24 : vector<2x8xf32> to vector<2x8x1xf32>
    %26 = vector.broadcast %25 : vector<2x8x1xf32> to vector<2x8x8xf32>
    %27 = arith.subf %23, %26 : vector<2x8x8xf32>
    %28 = math.exp %27 : vector<2x8x8xf32>
    %cst_22 = arith.constant dense<0.000000e+00> : vector<2x8xf32>
    %29 = vector.multi_reduction <add>, %28, %cst_22 [2] : vector<2x8x8xf32> to vector<2x8xf32>
    %30 = vector.shape_cast %29 : vector<2x8xf32> to vector<2x8x1xf32>
    %31 = tpu.reciprocal %30 {approx = true} : vector<2x8x1xf32> -> vector<2x8x1xf32>
    %32 = vector.broadcast %31 : vector<2x8x1xf32> to vector<2x8x8xf32>
    %33 = arith.mulf %28, %32 : vector<2x8x8xf32>
    "tpu.trace_start"() <{level = 10 : i32, message = "bqk,bkd->bqd"}> : () -> ()
    %cst_23 = arith.constant dense<0.000000e+00> : vector<2x8x128xf32>
    %34 = tpu.matmul %33, %20, %cst_23 {dimension_numbers = #tpu.dot_dimension_numbers<[2], [1], [1], [2], [0, 0, 0, 1, 1, 2], [0], [0]>} : vector<2x8x8xf32>, vector<2x8x128xf32>, vector<2x8x128xf32> -> vector<2x8x128xf32>
    "tpu.trace_stop"() : () -> ()
    %c0_24 = arith.constant 0 : index
    %35 = memref.load %arg9[%c0_24] : memref<1xf32, #tpu.memory_space<smem>>
    %36 = vector.broadcast %35 : f32 to vector<2x8x128xf32>
    %37 = arith.mulf %36, %34 : vector<2x8x128xf32>
    %c0_25 = arith.constant 0 : index
    %c0_26 = arith.constant 0 : index
    %c0_27 = arith.constant 0 : index
    %38 = vector.load %arg10[%c0_25, %c0_26, %c0_27] : memref<2x8x128xf32, #tpu.memory_space<vmem>>, vector<2x8x128xf32>
    tpu.vector_store %arg10[%c0_25, %c0_26, %c0_27], %37 {strides = array<i32>} : memref<2x8x128xf32, #tpu.memory_space<vmem>>, vector<2x8x128xf32>,
    %cst_28 = arith.constant 0.000000e+00 : f32
    %39 = vector.broadcast %cst_28 : f32 to vector<2x8x120xf32>
    %40 = tpu.concatenate %33, %39 in 2 : vector<2x8x8xf32>, vector<2x8x120xf32> -> vector<2x8x128xf32>
    %c0_29 = arith.constant 0 : index
    %c0_30 = arith.constant 0 : index
    %c0_31 = arith.constant 0 : index
    %41 = vector.load %arg11[%c0_29, %c0_30, %c0_31] : memref<2x8x128xf32, #tpu.memory_space<vmem>>, vector<2x8x128xf32>
    tpu.vector_store %arg11[%c0_29, %c0_30, %c0_31], %40 {strides = array<i32>} : memref<2x8x128xf32, #tpu.memory_space<vmem>>, vector<2x8x128xf32>,
    return
  }
}

</mosaic_0001>

<llo_original>
// kernel: _lambda_.1
$region0: #{_lambda_.1}
  #allocation0 [shape = 'u32[]', space=smem, size = 0x4, offset = 0x4, fixed_abs, tag = 'smem constant byte address 0x4 - core index']
  #allocation1 [shape = 'u32[72,128]{1,0:T(1,128)}', space=vmem, size = 0x9000, scoped, tag = 'internal scratch']
  #allocation2 [shape = 'f32[1]{0:T(128)S(6)}', space=smem, size = 0x200, scoped, tag = 'scoped memory for _lambda_.1']
  %s0 = inlined_call_operand.vmem [shape: f32[16,32], index: 0, kind: input, shape index: {}]
  %s1 = inlined_call_operand.vmem [shape: f32[16,32], index: 1, kind: input, shape index: {}]
  %s2 = inlined_call_operand.vmem [shape: f32[16,32], index: 2, kind: input, shape index: {}]
  %s3 = inlined_call_operand.vmem [shape: f32[32,128], index: 3, kind: input, shape index: {}]
  %s4 = inlined_call_operand.vmem [shape: f32[1,128], index: 4, kind: input, shape index: {}]
  %s5 = inlined_call_operand.vmem [shape: f32[32,128], index: 5, kind: input, shape index: {}]
  %s6 = inlined_call_operand.vmem [shape: f32[1,128], index: 6, kind: input, shape index: {}]
  %s7 = inlined_call_operand.vmem [shape: f32[32,128], index: 7, kind: input, shape index: {}]
  %s8 = inlined_call_operand.vmem [shape: f32[1,128], index: 8, kind: input, shape index: {}]
  %s9 = inlined_call_operand.<no memory space> [shape: f32[1], index: 9, kind: input, shape index: {}]
  %s10 = inlined_call_operand.hbm [shape: f32[2,8,128], index: 10, kind: output, shape index: {0}]
  %s11 = inlined_call_operand.hbm [shape: f32[2,8,128], index: 11, kind: output, shape index: {1}]
  %12 = xla_tuple %s10, %s11
  %s13 = sld [smem:[#allocation0]]
  $region58: #{_lambda_.1} parent=0
    _
  %s15 = ssub.s32 1, %s13
  %s16 = scalar_select 0, %s15, %s13
  %17 = sst [smem:[#allocation2]] %s9
  $region1: #{_lambda_.1} parent=0
    #allocation3 [shape = 'u8[8192]{0}', space=vmem, size = 0x2000, scoped, tag = 'output window, operand 0, single buffered']
    #allocation4 [shape = 's32[1]{0}', space=sflag, size = 0x4, scoped, tag = 'scoped memory for _lambda_.1']
    #allocation5 [shape = 'u8[8192]{0}', space=vmem, size = 0x2000, scoped, tag = 'output window, operand 1, single buffered']
    #allocation6 [shape = 's32[1]{0}', space=sflag, size = 0x4, scoped, tag = 'scoped memory for _lambda_.1']
    %18 = vsyncpa [#allocation4], 0
    %19 = vsyncpa [#allocation6], 0
    // Predicated region
    $region2: #{_lambda_.1} parent=1 // pred_check
      _
    $region3: #{_lambda_.1} parent=1 // pred_check_branch
      %21 = sbr.rel (0) target = $region5
    $region4: #{_lambda_.1} parent=1 // pred_region
      _
    $region5: #{_lambda_.1} parent=1 // pred_fallthru
      _
    // Predicated region
    $region6: #{_lambda_.1} parent=1 // pred_check
      _
    $region7: #{_lambda_.1} parent=1 // pred_check_branch
      %23 = sbr.rel (0) target = $region9
    $region8: #{_lambda_.1} parent=1 // pred_region
      _
    $region9: #{_lambda_.1} parent=1 // pred_fallthru
      _
    // Predicated region
    $region10: #{_lambda_.1} parent=1 // pred_check
      _
    $region11: #{_lambda_.1} parent=1 // pred_check_branch
      %25 = sbr.rel (0) target = $region13
    $region12: #{_lambda_.1} parent=1 // pred_region
      _
    $region13: #{_lambda_.1} parent=1 // pred_fallthru
      _
    // Predicated region
    $region14: #{_lambda_.1} parent=1 // pred_check
      _
    $region15: #{_lambda_.1} parent=1 // pred_check_branch
      %27 = sbr.rel (0) target = $region17
    $region16: #{_lambda_.1} parent=1 // pred_region
      _
    $region17: #{_lambda_.1} parent=1 // pred_fallthru
      _
    // Predicated region
    $region18: #{_lambda_.1} parent=1 // pred_check
      _
    $region19: #{_lambda_.1} parent=1 // pred_check_branch
      %29 = sbr.rel (0) target = $region21
    $region20: #{_lambda_.1} parent=1 // pred_region
      _
    $region21: #{_lambda_.1} parent=1 // pred_fallthru
      _
    // Predicated region
    $region22: #{_lambda_.1} parent=1 // pred_check
      _
    $region23: #{_lambda_.1} parent=1 // pred_check_branch
      %31 = sbr.rel (0) target = $region25
    $region24: #{_lambda_.1} parent=1 // pred_region
      _
    $region25: #{_lambda_.1} parent=1 // pred_fallthru
      _
    // Predicated region
    $region26: #{_lambda_.1} parent=1 // pred_check
      _
    $region27: #{_lambda_.1} parent=1 // pred_check_branch
      %33 = sbr.rel (0) target = $region29
    $region28: #{_lambda_.1} parent=1 // pred_region
      _
    $region29: #{_lambda_.1} parent=1 // pred_fallthru
      _
    // Predicated region
    $region30: #{_lambda_.1} parent=1 // pred_check
      _
    $region31: #{_lambda_.1} parent=1 // pred_check_branch
      %35 = sbr.rel (0) target = $region33
    $region32: #{_lambda_.1} parent=1 // pred_region
      _
    $region33: #{_lambda_.1} parent=1 // pred_fallthru
      _
    // Predicated region
    $region34: #{_lambda_.1} parent=1 // pred_check
      _
    $region35: #{_lambda_.1} parent=1 // pred_check_branch
      %37 = sbr.rel (0) target = $region37
    $region36: #{_lambda_.1} parent=1 // pred_region
      _
    $region37: #{_lambda_.1} parent=1 // pred_fallthru
      _
    // Predicated region
    $region38: #{_lambda_.1} parent=1 // pred_check
      _
    $region39: #{_lambda_.1} parent=1 // pred_check_branch
      %39 = sbr.rel (0) target = $region41
    $region40: #{_lambda_.1} parent=1 // pred_region
      _
    $region41: #{_lambda_.1} parent=1 // pred_fallthru
      _
    %v40 = vld [vmem:[%s0] sm:$0xff]
    %v41 = vld [vmem:[%s0 + $0x8] sm:$0xff]
    %v42 = vld [vmem:[%s3] sm:$0xff]
    %v43 = vld [vmem:[%s3 + $0x8] sm:$0xff]
    %v44 = vld [vmem:[%s3 + $0x10] sm:$0xff]
    %v45 = vld [vmem:[%s3 + $0x18] sm:$0xff]
    %v46 = vld [vmem:[%s4] sm:$0x1]
    %v48 = vperm.slane %v46, 0
    %vm50 = vcmask 261120
    %v52 = vsel %vm50, %v40, 0
    %v55 = vsel %vm50, %v41, 0
    %57 = vmatpush.msra.mxu0 0.0
    %58 = vmatpush.msra.mxu0 0.0
    %59 = vmatpush.msra.mxu0 0.0
    %60 = vmatpush.msra.mxu0 0.0
    %61 = vmatpush.msra.mxu0 0.0
    %62 = vmatpush.msra.mxu0 0.0
    %63 = vmatpush.msra.mxu0 0.0
    %64 = vmatpush.msra.mxu0 0.0
    %65 = vmatpush.msra.mxu0 0.0
    %66 = vmatpush.msra.mxu0 0.0
    %67 = vmatpush.msra.mxu0 0.0
    %68 = vmatpush.msra.mxu0 0.0
    %69 = vmatpush.msra.mxu0 %v45
    %70 = vmatpush.msra.mxu0 %v44
    %71 = vmatpush.msra.mxu0 %v43
    %72 = vmatpush.msra.mxu0 %v42
    %73 = vmatmul.f32.gmra.mxu0 %v52
    %v74 = vpop.f32.mrf.mxu0
    %v75 = vadd.f32 %v48, %v74
    %76 = vmatmul.f32.gmra.mxu0 %v55
    %v77 = vpop.f32.mrf.mxu0
    %v78 = vadd.f32 %v48, %v77
    %79 = vdwg.mxu0
    %v80 = vld [vmem:[%s1] sm:$0xff]
    %v81 = vld [vmem:[%s1 + $0x8] sm:$0xff]
    %v82 = vld [vmem:[%s5] sm:$0xff]
    %v83 = vld [vmem:[%s5 + $0x8] sm:$0xff]
    %v84 = vld [vmem:[%s5 + $0x10] sm:$0xff]
    %v85 = vld [vmem:[%s5 + $0x18] sm:$0xff]
    %v86 = vld [vmem:[%s6] sm:$0x1]
    %v88 = vperm.slane %v86, 0
    %v91 = vsel %vm50, %v80, 0
    %v94 = vsel %vm50, %v81, 0
    %96 = vmatpush.msra.mxu0 0.0
    %97 = vmatpush.msra.mxu0 0.0
    %98 = vmatpush.msra.mxu0 0.0
    %99 = vmatpush.msra.mxu0 0.0
    %100 = vmatpush.msra.mxu0 0.0
    %101 = vmatpush.msra.mxu0 0.0
    %102 = vmatpush.msra.mxu0 0.0
    %103 = vmatpush.msra.mxu0 0.0
    %104 = vmatpush.msra.mxu0 0.0
    %105 = vmatpush.msra.mxu0 0.0
    %106 = vmatpush.msra.mxu0 0.0
    %107 = vmatpush.msra.mxu0 0.0
    %108 = vmatpush.msra.mxu0 %v85
    %109 = vmatpush.msra.mxu0 %v84
    %110 = vmatpush.msra.mxu0 %v83
    %111 = vmatpush.msra.mxu0 %v82
    %112 = vmatmul.f32.gmra.mxu0 %v91
    %v113 = vpop.f32.mrf.mxu0
    %v114 = vadd.f32 %v88, %v113
    %115 = vmatmul.f32.gmra.mxu0 %v94
    %v116 = vpop.f32.mrf.mxu0
    %v117 = vadd.f32 %v88, %v116
    %118 = vdwg.mxu0
    %v119 = vld [vmem:[%s2] sm:$0xff]
    %v120 = vld [vmem:[%s2 + $0x8] sm:$0xff]
    %v121 = vld [vmem:[%s7] sm:$0xff]
    %v122 = vld [vmem:[%s7 + $0x8] sm:$0xff]
    %v123 = vld [vmem:[%s7 + $0x10] sm:$0xff]
    %v124 = vld [vmem:[%s7 + $0x18] sm:$0xff]
    %v125 = vld [vmem:[%s8] sm:$0x1]
    %v127 = vperm.slane %v125, 0
    %v130 = vsel %vm50, %v119, 0
    %v133 = vsel %vm50, %v120, 0
    %135 = vmatpush.msra.mxu0 0.0
    %136 = vmatpush.msra.mxu0 0.0
    %137 = vmatpush.msra.mxu0 0.0
    %138 = vmatpush.msra.mxu0 0.0
    %139 = vmatpush.msra.mxu0 0.0
    %140 = vmatpush.msra.mxu0 0.0
    %141 = vmatpush.msra.mxu0 0.0
    %142 = vmatpush.msra.mxu0 0.0
    %143 = vmatpush.msra.mxu0 0.0
    %144 = vmatpush.msra.mxu0 0.0
    %145 = vmatpush.msra.mxu0 0.0
    %146 = vmatpush.msra.mxu0 0.0
    %147 = vmatpush.msra.mxu0 %v124
    %148 = vmatpush.msra.mxu0 %v123
    %149 = vmatpush.msra.mxu0 %v122
    %150 = vmatpush.msra.mxu0 %v121
    %151 = vmatmul.f32.gmra.mxu0 %v130
    %v152 = vpop.f32.mrf.mxu0
    %v153 = vadd.f32 %v127, %v152
    %154 = vmatmul.f32.gmra.mxu0 %v133
    %v155 = vpop.f32.mrf.mxu0
    %v156 = vadd.f32 %v127, %v155
    %157 = vdwg.mxu0
    %158 = vmatpush.xpose.msra.mxu0 0.0
    %159 = vmatpush.xpose.msra.mxu0 0.0
    %160 = vmatpush.xpose.msra.mxu0 0.0
    %161 = vmatpush.xpose.msra.mxu0 0.0
    %162 = vmatpush.xpose.msra.mxu0 0.0
    %163 = vmatpush.xpose.msra.mxu0 0.0
    %164 = vmatpush.xpose.msra.mxu0 0.0
    %165 = vmatpush.xpose.msra.mxu0 0.0
    %166 = vmatpush.xpose.msra.mxu0 0.0
    %167 = vmatpush.xpose.msra.mxu0 0.0
    %168 = vmatpush.xpose.msra.mxu0 0.0
    %169 = vmatpush.xpose.msra.mxu0 0.0
    %170 = vmatpush.xpose.msra.mxu0 0.0
    %171 = vmatpush.xpose.msra.mxu0 0.0
    %172 = vmatpush.xpose.msra.mxu0 0.0
    %173 = vmatpush.xpose.msra.mxu0 %v114
    %174 = vmatmul.f32.gmra.mxu0 %v75
    %v175 = vpop.f32.mrf.mxu0
    %v176 = vadd.f32 0.0, %v175
    %177 = vdwg.mxu0
    %178 = vmatpush.xpose.msra.mxu0 0.0
    %179 = vmatpush.xpose.msra.mxu0 0.0
    %180 = vmatpush.xpose.msra.mxu0 0.0
    %181 = vmatpush.xpose.msra.mxu0 0.0
    %182 = vmatpush.xpose.msra.mxu0 0.0
    %183 = vmatpush.xpose.msra.mxu0 0.0
    %184 = vmatpush.xpose.msra.mxu0 0.0
    %185 = vmatpush.xpose.msra.mxu0 0.0
    %186 = vmatpush.xpose.msra.mxu0 0.0
    %187 = vmatpush.xpose.msra.mxu0 0.0
    %188 = vmatpush.xpose.msra.mxu0 0.0
    %189 = vmatpush.xpose.msra.mxu0 0.0
    %190 = vmatpush.xpose.msra.mxu0 0.0
    %191 = vmatpush.xpose.msra.mxu0 0.0
    %192 = vmatpush.xpose.msra.mxu0 0.0
    %193 = vmatpush.xpose.msra.mxu0 %v117
    %194 = vmatmul.f32.gmra.mxu0 %v78
    %v195 = vpop.f32.mrf.mxu0
    %v196 = vadd.f32 0.0, %v195
    %197 = vdwg.mxu0
    %v198 = vmul.f32 %v176, 0.17677669
    %v199 = vmul.f32 %v196, 0.17677669
    %vm200 = vcmask 64512
    %v201 = vsel %vm200, %v198, -inf
    %202 = vmax.xlane.f32.xlu0 %v201
    %v203 = vpop.xlane.xlu0 %202
    %v204 = vsel %vm200, %v199, -inf
    %205 = vmax.xlane.f32.xlu0 %v204
    %v206 = vpop.xlane.xlu0 %205
    %v207 = vsub.f32 %v198, %v203
    %v208 = vsub.f32 %v199, %v206
    %v209 = vmul.f32 %v207, 1.442695
    %v210 = vpow.pop %v209
    %v211 = vmul.f32 %v208, 1.442695
    %v212 = vpow.pop %v211
    %v213 = vsel %vm200, %v210, 0.0
    %214 = vadd.xlane.f32.xlu0 %v213
    %v215 = vpop.xlane.xlu0 %214
    %v216 = vsel %vm200, %v212, 0.0
    %217 = vadd.xlane.f32.xlu0 %v216
    %v218 = vpop.xlane.xlu0 %217
    %v219 = vrcp.pop %v215
    %v220 = vrcp.pop %v218
    %v221 = vmul.f32 %v210, %v219
    %v222 = vmul.f32 %v212, %v220
    %v224 = vsel %vm200, %v221, 0
    %226 = vmatpush.msra.mxu0 0.0
    %227 = vmatpush.msra.mxu0 0.0
    %228 = vmatpush.msra.mxu0 0.0
    %229 = vmatpush.msra.mxu0 0.0
    %230 = vmatpush.msra.mxu0 0.0
    %231 = vmatpush.msra.mxu0 0.0
    %232 = vmatpush.msra.mxu0 0.0
    %233 = vmatpush.msra.mxu0 0.0
    %234 = vmatpush.msra.mxu0 0.0
    %235 = vmatpush.msra.mxu0 0.0
    %236 = vmatpush.msra.mxu0 0.0
    %237 = vmatpush.msra.mxu0 0.0
    %238 = vmatpush.msra.mxu0 0.0
    %239 = vmatpush.msra.mxu0 0.0
    %240 = vmatpush.msra.mxu0 0.0
    %241 = vmatpush.msra.mxu0 %v153
    %242 = vmatmul.f32.gmra.mxu0 %v224
    %v243 = vpop.f32.mrf.mxu0
    %v244 = vadd.f32 0.0, %v243
    %245 = vdwg.mxu0
    %v247 = vsel %vm200, %v222, 0
    %249 = vmatpush.msra.mxu0 0.0
    %250 = vmatpush.msra.mxu0 0.0
    %251 = vmatpush.msra.mxu0 0.0
    %252 = vmatpush.msra.mxu0 0.0
    %253 = vmatpush.msra.mxu0 0.0
    %254 = vmatpush.msra.mxu0 0.0
    %255 = vmatpush.msra.mxu0 0.0
    %256 = vmatpush.msra.mxu0 0.0
    %257 = vmatpush.msra.mxu0 0.0
    %258 = vmatpush.msra.mxu0 0.0
    %259 = vmatpush.msra.mxu0 0.0
    %260 = vmatpush.msra.mxu0 0.0
    %261 = vmatpush.msra.mxu0 0.0
    %262 = vmatpush.msra.mxu0 0.0
    %263 = vmatpush.msra.mxu0 0.0
    %264 = vmatpush.msra.mxu0 %v156
    %265 = vmatmul.f32.gmra.mxu0 %v247
    %v266 = vpop.f32.mrf.mxu0
    %v267 = vadd.f32 0.0, %v266
    %268 = vdwg.mxu0
    %s269 = sld [smem:[#allocation2]]
    %v270 = vstv %s269
    %v271 = vmul.f32 %v270, %v244
    %v272 = vmul.f32 %v270, %v267
    %273 = vst [vmem:[#allocation3] sm:$0xff] %v271
    %274 = vst [vmem:[#allocation3 + $0x8] sm:$0xff] %v272
    %v275 = vsel %vm200, %v221, 0.0
    %v276 = vsel %vm200, %v222, 0.0
    %277 = vst [vmem:[#allocation5] sm:$0xff] %v275
    %278 = vst [vmem:[#allocation5 + $0x8] sm:$0xff] %v276
    // Predicated region
    $region42: #{_lambda_.1} parent=1 // pred_check
      _
    $region43: #{_lambda_.1} parent=1 // pred_check_branch
      %280 = sbr.rel (0) target = $region45
    $region44: #{_lambda_.1} parent=1 // pred_region
      %282 = vsyncadd [#allocation4], 0
      %s283 = sshll.u32 [#allocation3], 4
      %s284 = int_to_ptr.vmem [resolvable:$true] %s283
      %s285 = sshll.u32 %s10, 4
      %s286 = int_to_ptr.hbm [resolvable:$true] %s285
      %291 = dma.vmem_to_hbm [thread:$0]  %s284, 256, %s286, [#allocation4], 128, 128, 8
    $region45: #{_lambda_.1} parent=1 // pred_fallthru
      _
    // Predicated region
    $region46: #{_lambda_.1} parent=1 // pred_check
      _
    $region47: #{_lambda_.1} parent=1 // pred_check_branch
      %293 = sbr.rel (0) target = $region49
    $region48: #{_lambda_.1} parent=1 // pred_region
      %295 = vsyncadd [#allocation6], 0
      %s296 = sshll.u32 [#allocation5], 4
      %s297 = int_to_ptr.vmem [resolvable:$true] %s296
      %s298 = sshll.u32 %s11, 4
      %s299 = int_to_ptr.hbm [resolvable:$true] %s298
      %304 = dma.vmem_to_hbm [thread:$0]  %s297, 256, %s299, [#allocation6], 128, 128, 8
    $region49: #{_lambda_.1} parent=1 // pred_fallthru
      _
    // Predicated region
    $region50: #{_lambda_.1} parent=1 // pred_check
      _
    $region51: #{_lambda_.1} parent=1 // pred_check_branch
      %306 = sbr.rel (0) target = $region53
    $region52: #{_lambda_.1} parent=1 // pred_region
      %308 = dma.done [#allocation4], 256
    $region53: #{_lambda_.1} parent=1 // pred_fallthru
      _
    // Predicated region
    $region54: #{_lambda_.1} parent=1 // pred_check
      _
    $region55: #{_lambda_.1} parent=1 // pred_check_branch
      %310 = sbr.rel (0) target = $region57
    $region56: #{_lambda_.1} parent=1 // pred_region
      %312 = dma.done [#allocation6], 256
    $region57: #{_lambda_.1} parent=1 // pred_fallthru
      _
    %313 = vsyncpa [#allocation4], 1
    %314 = vsyncpa [#allocation6], 1

</llo_original>
